<compile_context>
chip_gen: v6e
topology: v6e:2x2x1
jax: 0.10.0
libtpu: 0.0.40
codegen_flags: <defaults>
</compile_context>

<pallas_src>
import functools

import jax
import jax.numpy as jnp
from jax.experimental import pallas as pl
from jax.experimental.pallas import tpu as pltpu

LN_EPS = 1e-5
WEIGHTS_FINAL_INIT = 0.003
BIAS_FINAL_INIT = 0.0003

CONFIGS = {"action_space": 1, "fc": [20, 30], "batch_size": 32}

_SLAB_COLS = 128  # one full lane-tile; params are tiny so this costs nothing


def _round_up(x, m):
    return (x + m - 1) // m * m


def _slab_layout(in_dim, f1, f2, out_dim):
    """Row offsets of the per-layer blocks inside the packed parameter slab."""
    assert max(in_dim + 3, f1 + 3, f2, out_dim) <= _SLAB_COLS, \
        "feature dims too wide for the 128-column parameter slab"
    r1 = 0                                # fc1: W1^T | b1 | gamma1 | beta1
    r2 = _round_up(f1, 8)                 # fc2: W2^T | b2 | gamma2 | beta2
    r3 = r2 + _round_up(f2, 8)            # mu weight, feature-major (f2, out_dim)
    r4 = r3 + _round_up(f2, 8)            # mu bias as a column (out_dim, 1)
    rows = _round_up(r4 + out_dim, 8)
    return r1, r2, r3, r4, rows, _SLAB_COLS


def actor_dims(params):
    in_dim, f1 = params["w1"].shape
    f2 = params["w2"].shape[1]
    out_dim = params["w3"].shape[1]
    return in_dim, f1, f2, out_dim


def pack_actor_params(params):
    """Pack all 10 parameter tensors into one (rows, 128) f32 slab.

    Call ONCE when parameters are created/updated (not per forward call).
    Layer 1/2 blocks: rows [ri : ri+out_features), cols [0:in_features) = W^T,
    then single columns for bias, gamma, beta.  The mu layer stores its weight
    feature-major (f2, out_dim) and its bias as a column so the kernel can use
    a VPU multiply-reduce for out_dim == 1.
    """
    p = params
    in_dim, f1, f2, out_dim = actor_dims(p)
    r1, r2, r3, r4, rows, cols = _slab_layout(in_dim, f1, f2, out_dim)

    slab = jnp.zeros((rows, cols), jnp.float32)
    slab = slab.at[r1:r1 + f1, 0:in_dim].set(p["w1"].T)
    slab = slab.at[r1:r1 + f1, in_dim].set(p["b1"].reshape(f1))
    slab = slab.at[r1:r1 + f1, in_dim + 1].set(p["g1"].reshape(f1))
    slab = slab.at[r1:r1 + f1, in_dim + 2].set(p["be1"].reshape(f1))
    slab = slab.at[r2:r2 + f2, 0:f1].set(p["w2"].T)
    slab = slab.at[r2:r2 + f2, f1].set(p["b2"].reshape(f2))
    slab = slab.at[r2:r2 + f2, f1 + 1].set(p["g2"].reshape(f2))
    slab = slab.at[r2:r2 + f2, f1 + 2].set(p["be2"].reshape(f2))
    slab = slab.at[r3:r3 + f2, 0:out_dim].set(p["w3"])            # feature-major
    slab = slab.at[r4:r4 + out_dim, 0].set(p["b3"].reshape(out_dim))
    return slab


def _ln_relu_cols(h, gamma, beta):
    """LayerNorm over the feature axis (axis 0; batch on lanes), then ReLU.

    Single-pass statistics: mean and mean-of-squares both depend only on h, so
    the two cross-sublane reductions overlap on the XLU and the dependent
    (h - mean)^2 pass of the textbook formulation disappears.  h has exactly
    the true feature count on axis 0 (slab slices are exact), so the divisor
    is correct regardless of sublane padding.
    """
    mean = jnp.mean(h, axis=0, keepdims=True)
    msq = jnp.mean(h * h, axis=0, keepdims=True)
    var = msq - mean * mean
    h = (h - mean) * jax.lax.rsqrt(var + LN_EPS) * gamma + beta
    return jnp.maximum(h, 0.0)


def actor_kernel(x_ref, p_ref, o_ref, *, in_dim, f1, f2, out_dim,
                 r1, r2, r3, r4):
    # x tile is feature-major (in_dim, tb): lane-dense, batch on lanes.
    x = x_ref[...].astype(jnp.float32)

    # Static slices into the VMEM-resident parameter slab.
    w1t = p_ref[r1:r1 + f1, 0:in_dim]                 # (f1, in_dim)
    b1 = p_ref[r1:r1 + f1, in_dim:in_dim + 1]         # (f1, 1)
    g1 = p_ref[r1:r1 + f1, in_dim + 1:in_dim + 2]
    be1 = p_ref[r1:r1 + f1, in_dim + 2:in_dim + 3]
    w2t = p_ref[r2:r2 + f2, 0:f1]                     # (f2, f1)
    b2 = p_ref[r2:r2 + f2, f1:f1 + 1]
    g2 = p_ref[r2:r2 + f2, f1 + 1:f1 + 2]
    be2 = p_ref[r2:r2 + f2, f1 + 2:f1 + 3]
    w3 = p_ref[r3:r3 + f2, 0:out_dim]                 # (f2, out_dim), feature-major
    b3 = p_ref[r4:r4 + out_dim, 0:1]                  # (out_dim, 1)

    # fc1 -> LN -> ReLU : plain (f1, in_dim) @ (in_dim, tb) on the MXU.
    h1 = jnp.dot(w1t, x, preferred_element_type=jnp.float32) + b1   # (f1, tb)
    h1 = _ln_relu_cols(h1, g1, be1)

    # fc2 -> LN -> ReLU
    h2 = jnp.dot(w2t, h1, preferred_element_type=jnp.float32) + b2  # (f2, tb)
    h2 = _ln_relu_cols(h2, g2, be2)

    # mu -> tanh. out_dim == 1: broadcast multiply + sublane reduce (VPU/XLU)
    # instead of a 1-row-output MXU matmul that is nearly pure push overhead.
    if out_dim == 1:
        mu = jnp.sum(h2 * w3, axis=0, keepdims=True) + b3           # (1, tb)
    else:
        mu = jax.lax.dot_general(
            w3, h2, (((0,), (0,)), ((), ())),
            preferred_element_type=jnp.float32) + b3                # (out_dim, tb)
    o_ref[...] = jnp.tanh(mu).astype(o_ref.dtype)


@functools.partial(jax.jit, static_argnames=("dims", "block_batch"))
def actor_forward(x, slab, *, dims, block_batch=2048):
    """Fused Actor forward.

    x: (B, input_size) batch-major (as in the torch module).
    slab: pre-packed parameter slab from pack_actor_params (pack once).
    dims: static (input_size, fc1, fc2, action_space).
    """
    in_dim, f1, f2, out_dim = dims
    B, x_in = x.shape
    assert x_in == in_dim, (x_in, in_dim)
    r1, r2, r3, r4, rows, cols = _slab_layout(in_dim, f1, f2, out_dim)
    assert slab.shape == (rows, cols), (slab.shape, (rows, cols))
    assert block_batch % 128 == 0 and 0 < block_batch <= 8192, \
        "block_batch must be a multiple of 128 (and <= 8192: padded x buffers " \
        "grow ~512 KiB per extra 1024 rows; re-check VMEM before raising)"

    # One-time layout change: feature-major x so kernel blocks are lane-dense.
    xt = x.T                                            # (in_dim, B)

    # Tile selection: small B -> single full block (any B, incl. B % 128 != 0).
    # Large B -> target ~4 grid steps (2 TCs on v7x x 2 pipeline stages) with a
    # 512-row floor so v5e/v6e per-step overhead stays negligible; Pallas masks
    # the partial last block.
    if B <= 512:
        tb = B
    else:
        tb = min(block_batch, max(512, _round_up(pl.cdiv(B, 4), 128)))
    grid = (pl.cdiv(B, tb),)

    kernel = functools.partial(
        actor_kernel, in_dim=in_dim, f1=f1, f2=f2, out_dim=out_dim,
        r1=r1, r2=r2, r3=r3, r4=r4)

    flops = 2 * B * (in_dim * f1 + f1 * f2 + f2 * out_dim)
    out_t = pl.pallas_call(
        kernel,
        out_shape=jax.ShapeDtypeStruct((out_dim, B), jnp.float32),
        grid=grid,
        in_specs=[
            pl.BlockSpec((in_dim, tb), lambda i: (0, i)),   # lane-dense x tile
            pl.BlockSpec((rows, cols), lambda i: (0, 0)),   # resident params
        ],
        out_specs=pl.BlockSpec((out_dim, tb), lambda i: (0, i)),  # lane-dense
        compiler_params=pltpu.CompilerParams(
            dimension_semantics=("parallel",)),
        cost_estimate=pl.CostEstimate(
            flops=flops,
            transcendentals=B * (2 + out_dim),              # 2x rsqrt + tanh
            bytes_accessed=B * (in_dim + out_dim) * 4 + rows * cols * 4),
    )(xt, slab)

    # (out_dim, B) -> (B, out_dim); free for out_dim == 1.
    return out_t.T


def init_actor_params(key, input_size, output_size, configs):
    """Deterministic init mirroring PyTorch defaults + Actor's final-layer init."""
    fc1, fc2 = configs["fc"]
    keys = jax.random.split(key, 6)

    def linear_init(kw, kb, fan_in, fan_out):
        bound = 1.0 / jnp.sqrt(fan_in)
        # stored as [in, out] (transposed relative to torch's [out, in])
        w = jax.random.uniform(kw, (fan_in, fan_out), jnp.float32, -bound, bound)
        b = jax.random.uniform(kb, (1, fan_out), jnp.float32, -bound, bound)
        return w, b

    w1, b1 = linear_init(keys[0], keys[1], input_size, fc1)
    w2, b2 = linear_init(keys[2], keys[3], fc1, fc2)
    w3 = jax.random.uniform(
        keys[4], (fc2, output_size), jnp.float32,
        -WEIGHTS_FINAL_INIT, WEIGHTS_FINAL_INIT)
    b3 = jax.random.uniform(
        keys[5], (1, output_size), jnp.float32,
        -BIAS_FINAL_INIT, BIAS_FINAL_INIT)

    return {
        "w1": w1, "b1": b1,
        "g1": jnp.ones((1, fc1), jnp.float32), "be1": jnp.zeros((1, fc1), jnp.float32),
        "w2": w2, "b2": b2,
        "g2": jnp.ones((1, fc2), jnp.float32), "be2": jnp.zeros((1, fc2), jnp.float32),
        "w3": w3, "b3": b3,
    }


def actor_ref(x, p):
    """Pure-JAX (batch-major) reference for correctness check."""
    def ln(h, g, b):
        m = jnp.mean(h, axis=-1, keepdims=True)
        v = jnp.mean((h - m) ** 2, axis=-1, keepdims=True)
        return (h - m) * jax.lax.rsqrt(v + LN_EPS) * g + b

    h = jnp.maximum(ln(x @ p["w1"] + p["b1"], p["g1"], p["be1"]), 0.0)
    h = jnp.maximum(ln(h @ p["w2"] + p["b2"], p["g2"], p["be2"]), 0.0)
    return jnp.tanh(h @ p["w3"] + p["b3"])


if __name__ == "__main__":
    key = jax.random.PRNGKey(0)
    k_param, k_x, k_x2 = jax.random.split(key, 3)

    input_size = 8                          # state dimension
    output_size = CONFIGS["action_space"]   # 1
    batch = CONFIGS["batch_size"]           # 32

    params = init_actor_params(k_param, input_size, output_size, CONFIGS)
    dims = (input_size, CONFIGS["fc"][0], CONFIGS["fc"][1], output_size)
    # Pack the parameter slab ONCE (outside the jitted forward); in training it
    # would be re-packed only after an optimizer step.
    slab = pack_actor_params(params)

    # Small batch (single full block, grid == 1).
    x = jax.random.normal(k_x, (batch, input_size), jnp.float32)
    out = jax.block_until_ready(actor_forward(x, slab, dims=dims))
    ref = actor_ref(x, params)
    assert out.shape == (batch, output_size), out.shape
    err = float(jnp.max(jnp.abs(out - ref)))
    assert jnp.allclose(out, ref, atol=1e-5, rtol=1e-5), f"max abs err {err}"

    # Larger batch exercising the multi-step grid path with a partial last block.
    x_big = jax.random.normal(k_x2, (1000, input_size), jnp.float32)
    out_big = jax.block_until_ready(
        actor_forward(x_big, slab, dims=dims, block_batch=256))
    ref_big = actor_ref(x_big, params)
    assert out_big.shape == (1000, output_size), out_big.shape
    err_big = float(jnp.max(jnp.abs(out_big - ref_big)))
    assert jnp.allclose(out_big, ref_big, atol=1e-5, rtol=1e-5), f"max abs err {err_big}"

    print("KERNEL_OK")
</pallas_src>

<mosaic_0001>
module attributes {stable_mosaic.version = 11 : i64} {
  func.func @actor_kernel(%arg0: i32, %arg1: memref<8x32xf32, #tpu.memory_space<vmem>>, %arg2: memref<96x128xf32, #tpu.memory_space<vmem>>, %arg3: memref<1x32xf32, #tpu.memory_space<vmem>>) attributes {dimension_semantics = [#tpu.dimension_semantics<parallel>], iteration_bounds = array<i64: 1>, scalar_prefetch = 0 : i64, scratch_operands = 0 : i64, tpu.core_type = #tpu.core_type<tc>, window_params = [{transform_indices = @transform_0, window_bounds = array<i64: 8, 32>}, {pipeline_mode = #tpu.pipeline_mode<synchronous>, transform_indices = @transform_1, window_bounds = array<i64: 96, 128>}, {transform_indices = @transform_2, window_bounds = array<i64: 1, 32>}]} {
    %c0 = arith.constant 0 : index
    %c0_0 = arith.constant 0 : index
    %0 = vector.load %arg1[%c0, %c0_0] : memref<8x32xf32, #tpu.memory_space<vmem>>, vector<8x32xf32>
    %c0_1 = arith.constant 0 : index
    %c0_2 = arith.constant 0 : index
    %1 = vector.load %arg2[%c0_1, %c0_2] : memref<96x128xf32, #tpu.memory_space<vmem>>, vector<20x8xf32>
    %c0_3 = arith.constant 0 : index
    %c8 = arith.constant 8 : index
    %2 = vector.load %arg2[%c0_3, %c8] : memref<96x128xf32, #tpu.memory_space<vmem>>, vector<20x1xf32>
    %c0_4 = arith.constant 0 : index
    %c9 = arith.constant 9 : index
    %3 = vector.load %arg2[%c0_4, %c9] : memref<96x128xf32, #tpu.memory_space<vmem>>, vector<20x1xf32>
    %c0_5 = arith.constant 0 : index
    %c10 = arith.constant 10 : index
    %4 = vector.load %arg2[%c0_5, %c10] : memref<96x128xf32, #tpu.memory_space<vmem>>, vector<20x1xf32>
    %c24 = arith.constant 24 : index
    %c0_6 = arith.constant 0 : index
    %5 = vector.load %arg2[%c24, %c0_6] : memref<96x128xf32, #tpu.memory_space<vmem>>, vector<30x20xf32>
    %c24_7 = arith.constant 24 : index
    %c20 = arith.constant 20 : index
    %6 = vector.load %arg2[%c24_7, %c20] : memref<96x128xf32, #tpu.memory_space<vmem>>, vector<30x1xf32>
    %c24_8 = arith.constant 24 : index
    %c21 = arith.constant 21 : index
    %7 = vector.load %arg2[%c24_8, %c21] : memref<96x128xf32, #tpu.memory_space<vmem>>, vector<30x1xf32>
    %c24_9 = arith.constant 24 : index
    %c22 = arith.constant 22 : index
    %8 = vector.load %arg2[%c24_9, %c22] : memref<96x128xf32, #tpu.memory_space<vmem>>, vector<30x1xf32>
    %c56 = arith.constant 56 : index
    %c0_10 = arith.constant 0 : index
    %9 = vector.load %arg2[%c56, %c0_10] : memref<96x128xf32, #tpu.memory_space<vmem>>, vector<30x1xf32>
    %c88 = arith.constant 88 : index
    %c0_11 = arith.constant 0 : index
    %10 = vector.load %arg2[%c88, %c0_11] : memref<96x128xf32, #tpu.memory_space<vmem>>, vector<1x1xf32>
    %cst = arith.constant dense<0.000000e+00> : vector<20x32xf32>
    %11 = tpu.matmul %1, %0, %cst {dimension_numbers = #tpu.dot_dimension_numbers<[1], [0], [0], [1], [0, 0, 1, 1], [], []>} : vector<20x8xf32>, vector<8x32xf32>, vector<20x32xf32> -> vector<20x32xf32>
    %12 = vector.broadcast %2 : vector<20x1xf32> to vector<20x32xf32>
    %13 = arith.addf %11, %12 : vector<20x32xf32>
    %cst_12 = arith.constant dense<0.000000e+00> : vector<32xf32>
    %14 = vector.multi_reduction <add>, %13, %cst_12 [0] : vector<20x32xf32> to vector<32xf32>
    %15 = vector.shape_cast %14 : vector<32xf32> to vector<1x32xf32>
    %cst_13 = arith.constant 2.000000e+01 : f32
    %16 = vector.broadcast %cst_13 : f32 to vector<1x32xf32>
    %17 = arith.divf %15, %16 : vector<1x32xf32>
    %18 = arith.mulf %13, %13 : vector<20x32xf32>
    %cst_14 = arith.constant dense<0.000000e+00> : vector<32xf32>
    %19 = vector.multi_reduction <add>, %18, %cst_14 [0] : vector<20x32xf32> to vector<32xf32>
    %20 = vector.shape_cast %19 : vector<32xf32> to vector<1x32xf32>
    %cst_15 = arith.constant 2.000000e+01 : f32
    %21 = vector.broadcast %cst_15 : f32 to vector<1x32xf32>
    %22 = arith.divf %20, %21 : vector<1x32xf32>
    %23 = arith.mulf %17, %17 : vector<1x32xf32>
    %24 = arith.subf %22, %23 : vector<1x32xf32>
    %25 = vector.broadcast %17 : vector<1x32xf32> to vector<20x32xf32>
    %26 = arith.subf %13, %25 : vector<20x32xf32>
    %cst_16 = arith.constant 9.99999974E-6 : f32
    %27 = vector.broadcast %cst_16 : f32 to vector<1x32xf32>
    %28 = arith.addf %24, %27 : vector<1x32xf32>
    %29 = math.rsqrt %28 : vector<1x32xf32>
    %30 = vector.broadcast %29 : vector<1x32xf32> to vector<20x32xf32>
    %31 = arith.mulf %26, %30 : vector<20x32xf32>
    %32 = vector.broadcast %3 : vector<20x1xf32> to vector<20x32xf32>
    %33 = arith.mulf %31, %32 : vector<20x32xf32>
    %34 = vector.broadcast %4 : vector<20x1xf32> to vector<20x32xf32>
    %35 = arith.addf %33, %34 : vector<20x32xf32>
    %cst_17 = arith.constant 0.000000e+00 : f32
    %36 = vector.broadcast %cst_17 : f32 to vector<20x32xf32>
    %37 = arith.maximumf %35, %36 : vector<20x32xf32>
    %cst_18 = arith.constant dense<0.000000e+00> : vector<30x32xf32>
    %38 = tpu.matmul %5, %37, %cst_18 {dimension_numbers = #tpu.dot_dimension_numbers<[1], [0], [0], [1], [0, 0, 1, 1], [], []>} : vector<30x20xf32>, vector<20x32xf32>, vector<30x32xf32> -> vector<30x32xf32>
    %39 = vector.broadcast %6 : vector<30x1xf32> to vector<30x32xf32>
    %40 = arith.addf %38, %39 : vector<30x32xf32>
    %cst_19 = arith.constant dense<0.000000e+00> : vector<32xf32>
    %41 = vector.multi_reduction <add>, %40, %cst_19 [0] : vector<30x32xf32> to vector<32xf32>
    %42 = vector.shape_cast %41 : vector<32xf32> to vector<1x32xf32>
    %cst_20 = arith.constant 3.000000e+01 : f32
    %43 = vector.broadcast %cst_20 : f32 to vector<1x32xf32>
    %44 = arith.divf %42, %43 : vector<1x32xf32>
    %45 = arith.mulf %40, %40 : vector<30x32xf32>
    %cst_21 = arith.constant dense<0.000000e+00> : vector<32xf32>
    %46 = vector.multi_reduction <add>, %45, %cst_21 [0] : vector<30x32xf32> to vector<32xf32>
    %47 = vector.shape_cast %46 : vector<32xf32> to vector<1x32xf32>
    %cst_22 = arith.constant 3.000000e+01 : f32
    %48 = vector.broadcast %cst_22 : f32 to vector<1x32xf32>
    %49 = arith.divf %47, %48 : vector<1x32xf32>
    %50 = arith.mulf %44, %44 : vector<1x32xf32>
    %51 = arith.subf %49, %50 : vector<1x32xf32>
    %52 = vector.broadcast %44 : vector<1x32xf32> to vector<30x32xf32>
    %53 = arith.subf %40, %52 : vector<30x32xf32>
    %cst_23 = arith.constant 9.99999974E-6 : f32
    %54 = vector.broadcast %cst_23 : f32 to vector<1x32xf32>
    %55 = arith.addf %51, %54 : vector<1x32xf32>
    %56 = math.rsqrt %55 : vector<1x32xf32>
    %57 = vector.broadcast %56 : vector<1x32xf32> to vector<30x32xf32>
    %58 = arith.mulf %53, %57 : vector<30x32xf32>
    %59 = vector.broadcast %7 : vector<30x1xf32> to vector<30x32xf32>
    %60 = arith.mulf %58, %59 : vector<30x32xf32>
    %61 = vector.broadcast %8 : vector<30x1xf32> to vector<30x32xf32>
    %62 = arith.addf %60, %61 : vector<30x32xf32>
    %cst_24 = arith.constant 0.000000e+00 : f32
    %63 = vector.broadcast %cst_24 : f32 to vector<30x32xf32>
    %64 = arith.maximumf %62, %63 : vector<30x32xf32>
    %65 = vector.broadcast %9 : vector<30x1xf32> to vector<30x32xf32>
    %66 = arith.mulf %64, %65 : vector<30x32xf32>
    %cst_25 = arith.constant dense<0.000000e+00> : vector<32xf32>
    %67 = vector.multi_reduction <add>, %66, %cst_25 [0] : vector<30x32xf32> to vector<32xf32>
    %68 = vector.shape_cast %67 : vector<32xf32> to vector<1x32xf32>
    %69 = vector.broadcast %10 : vector<1x1xf32> to vector<1x32xf32>
    %70 = arith.addf %68, %69 : vector<1x32xf32>
    %71 = math.tanh %70 : vector<1x32xf32>
    %c0_26 = arith.constant 0 : index
    %c0_27 = arith.constant 0 : index
    %72 = vector.load %arg3[%c0_26, %c0_27] : memref<1x32xf32, #tpu.memory_space<vmem>>, vector<1x32xf32>
    tpu.vector_store %arg3[%c0_26, %c0_27], %71 {strides = array<i32>} : memref<1x32xf32, #tpu.memory_space<vmem>>, vector<1x32xf32>,
    return
  }
  func.func @transform_0(%arg0: i32) -> (i32, i32) {
    %c0_i32 = arith.constant 0 : i32
    %c0_i32_0 = arith.constant 0 : i32
    return %c0_i32, %arg0 : i32, i32
  }
  func.func @transform_1(%arg0: i32) -> (i32, i32) {
    %c0_i32 = arith.constant 0 : i32
    %c0_i32_0 = arith.constant 0 : i32
    %c0_i32_1 = arith.constant 0 : i32
    return %c0_i32, %c0_i32_0 : i32, i32
  }
  func.func @transform_2(%arg0: i32) -> (i32, i32) {
    %c0_i32 = arith.constant 0 : i32
    %c0_i32_0 = arith.constant 0 : i32
    return %c0_i32, %arg0 : i32, i32
  }
}

</mosaic_0001>

<llo_original>
// kernel: actor_forward.1
$region0: #{actor_forward.1}
  #allocation0 [shape = 'u32[]', space=smem, size = 0x4, offset = 0x4, fixed_abs, tag = 'smem constant byte address 0x4 - core index']
  #allocation1 [shape = 'u32[144,128]{1,0:T(1,128)}', space=vmem, size = 0x12000, scoped, tag = 'internal scratch']
  %s0 = inlined_call_operand.hbm [shape: f32[8,32], index: 0, kind: input, shape index: {}]
  %s1 = inlined_call_operand.hbm [shape: f32[96,128], index: 1, kind: input, shape index: {}]
  %s2 = inlined_call_operand.hbm [shape: f32[1,32], index: 2, kind: output, shape index: {}]
  %s3 = sld [smem:[#allocation0]]
  $region26: #{actor_forward.1} parent=0
    _
  %s5 = ssub.s32 1, %s3
  %s6 = scalar_select 0, %s5, %s3
  $region1: #{actor_forward.1} parent=0
    #allocation2 [shape = 'u8[4096]{0}', space=vmem, size = 0x1000, scoped, tag = 'input window, operand 0, single buffered']
    #allocation3 [shape = 's32[1]{0}', space=sflag, size = 0x4, scoped, tag = 'scoped memory for actor_forward.1']
    #allocation4 [shape = 's32[1]{0}', space=sflag, size = 0x4, scoped, tag = 'scoped memory for actor_forward.1']
    #allocation5 [shape = 'u8[49152]{0}', space=vmem, size = 0xc000, scoped, tag = 'input window, operand 1, single buffered']
    #allocation6 [shape = 's32[1]{0}', space=sflag, size = 0x4, scoped, tag = 'scoped memory for actor_forward.1']
    #allocation7 [shape = 'u8[512]{0}', space=vmem, size = 0x400, scoped, tag = 'output window, operand 0, single buffered']
    %7 = vsyncpa [#allocation3], 0
    %8 = vsyncpa [#allocation6], 0
    %9 = vsyncpa [#allocation4], 0
    // Predicated region
    $region2: #{actor_forward.1} parent=1 // pred_check
      _
    $region3: #{actor_forward.1} parent=1 // pred_check_branch
      %11 = sbr.rel (0) target = $region5
    $region4: #{actor_forward.1} parent=1 // pred_region
      %s13 = ssub.s32 128, 128
      %14 = vsyncadd [#allocation3], %s13
      %s16 = sshll.u32 [#allocation2], 4
      %s17 = int_to_ptr.vmem [resolvable:$true] %s16
      %19 = dma.hbm_to_vmem [thread:$0]  %s0, 128, %s17, [#allocation3]
    $region5: #{actor_forward.1} parent=1 // pred_fallthru
      _
    // Predicated region
    $region6: #{actor_forward.1} parent=1 // pred_check
      _
    $region7: #{actor_forward.1} parent=1 // pred_check_branch
      %21 = sbr.rel (0) target = $region9
    $region8: #{actor_forward.1} parent=1 // pred_region
      %s23 = ssub.s32 1536, 1536
      %24 = vsyncadd [#allocation6], %s23
      %s25 = sshll.u32 [#allocation5], 4
      %s26 = int_to_ptr.vmem [resolvable:$true] %s25
      %31 = dma.hbm_to_vmem [thread:$0]  %s1, 1536, %s26, [#allocation6], 128, 128, 8
    $region9: #{actor_forward.1} parent=1 // pred_fallthru
      _
    // Predicated region
    $region10: #{actor_forward.1} parent=1 // pred_check
      _
    $region11: #{actor_forward.1} parent=1 // pred_check_branch
      %33 = sbr.rel (0) target = $region13
    $region12: #{actor_forward.1} parent=1 // pred_region
      %34 = dma.done [#allocation3], 128
    $region13: #{actor_forward.1} parent=1 // pred_fallthru
      _
    // Predicated region
    $region14: #{actor_forward.1} parent=1 // pred_check
      _
    $region15: #{actor_forward.1} parent=1 // pred_check_branch
      %36 = sbr.rel (0) target = $region17
    $region16: #{actor_forward.1} parent=1 // pred_region
      %37 = dma.done [#allocation6], 1536
    $region17: #{actor_forward.1} parent=1 // pred_fallthru
      _
    %v38 = vld [vmem:[#allocation2] sm:$0xff]
    %v39 = vld [vmem:[#allocation5] sm:$0xff]
    %v40 = vld [vmem:[#allocation5 + $0x8] sm:$0xff]
    %v41 = vld [vmem:[#allocation5 + $0x10] sm:$0xf]
    %v42 = vld [vmem:[#allocation5 + $0x18] sm:$0xff]
    %v43 = vld [vmem:[#allocation5 + $0x20] sm:$0xff]
    %v44 = vld [vmem:[#allocation5 + $0x28] sm:$0xff]
    %v45 = vld [vmem:[#allocation5 + $0x30] sm:$0x3f]
    %v46 = vld [vmem:[#allocation5 + $0x38] sm:$0xff]
    %v47 = vld [vmem:[#allocation5 + $0x40] sm:$0xff]
    %v48 = vld [vmem:[#allocation5 + $0x48] sm:$0xff]
    %v49 = vld [vmem:[#allocation5 + $0x50] sm:$0x3f]
    %v50 = vld [vmem:[#allocation5 + $0x58] sm:$0x1]
    %52 = vset.pattern.permute.xlu0 8
    %53 = vperm.xlu0 %52, %v39
    %v54 = vpop.permute.xlu0 %53
    %57 = vset.pattern.permute.xlu0 8
    %58 = vperm.xlu0 %57, %v40
    %v59 = vpop.permute.xlu0 %58
    %62 = vset.pattern.permute.xlu0 8
    %63 = vperm.xlu0 %62, %v41
    %v64 = vpop.permute.xlu0 %63
    %vm66 = vcmask 64512
    %v67 = vsel %vm66, %v39, 0
    %v69 = vsel %vm66, %v40, 0
    %v71 = vsel %vm66, %v41, 0
    %73 = vmatprep.subr.mxu0 0.0
    %74 = vmatpush1.msra.mxu0 0.0
    %75 = vmatprep.subr.mxu0 0.0
    %76 = vmatpush1.msra.mxu0 0.0
    %77 = vmatprep.subr.mxu0 0.0
    %78 = vmatpush1.msra.mxu0 0.0
    %79 = vmatprep.subr.mxu0 0.0
    %80 = vmatpush1.msra.mxu0 0.0
    %81 = vmatprep.subr.mxu0 0.0
    %82 = vmatpush1.msra.mxu0 0.0
    %83 = vmatprep.subr.mxu0 0.0
    %84 = vmatpush1.msra.mxu0 0.0
    %85 = vmatprep.subr.mxu0 0.0
    %86 = vmatpush1.msra.mxu0 0.0
    %87 = vmatprep.subr.mxu0 0.0
    %88 = vmatpush1.msra.mxu0 0.0
    %89 = vmatprep.subr.mxu0 0.0
    %90 = vmatpush1.msra.mxu0 0.0
    %91 = vmatprep.subr.mxu0 0.0
    %92 = vmatpush1.msra.mxu0 0.0
    %93 = vmatprep.subr.mxu0 0.0
    %94 = vmatpush1.msra.mxu0 0.0
    %95 = vmatprep.subr.mxu0 0.0
    %96 = vmatpush1.msra.mxu0 0.0
    %97 = vmatprep.subr.mxu0 0.0
    %98 = vmatpush1.msra.mxu0 0.0
    %99 = vmatprep.subr.mxu0 0.0
    %100 = vmatpush1.msra.mxu0 0.0
    %101 = vmatprep.subr.mxu0 0.0
    %102 = vmatpush1.msra.mxu0 0.0
    %103 = vmatprep.subr.mxu0 0.0
    %104 = vmatpush1.msra.mxu0 %v38
    %105 = vmatprep.subr.mxu0 0.0
    %106 = vmatpush2.msra.mxu0 0.0
    %107 = vmatprep.subr.mxu0 0.0
    %108 = vmatpush2.msra.mxu0 0.0
    %109 = vmatprep.subr.mxu0 0.0
    %110 = vmatpush2.msra.mxu0 0.0
    %111 = vmatprep.subr.mxu0 0.0
    %112 = vmatpush2.msra.mxu0 0.0
    %113 = vmatprep.subr.mxu0 0.0
    %114 = vmatpush2.msra.mxu0 0.0
    %115 = vmatprep.subr.mxu0 0.0
    %116 = vmatpush2.msra.mxu0 0.0
    %117 = vmatprep.subr.mxu0 0.0
    %118 = vmatpush2.msra.mxu0 0.0
    %119 = vmatprep.subr.mxu0 0.0
    %120 = vmatpush2.msra.mxu0 0.0
    %121 = vmatprep.subr.mxu0 0.0
    %122 = vmatpush2.msra.mxu0 0.0
    %123 = vmatprep.subr.mxu0 0.0
    %124 = vmatpush2.msra.mxu0 0.0
    %125 = vmatprep.subr.mxu0 0.0
    %126 = vmatpush2.msra.mxu0 0.0
    %127 = vmatprep.subr.mxu0 0.0
    %128 = vmatpush2.msra.mxu0 0.0
    %129 = vmatprep.subr.mxu0 0.0
    %130 = vmatpush2.msra.mxu0 0.0
    %131 = vmatprep.subr.mxu0 0.0
    %132 = vmatpush2.msra.mxu0 0.0
    %133 = vmatprep.subr.mxu0 0.0
    %134 = vmatpush2.msra.mxu0 0.0
    %135 = vmatprep.subr.mxu0 0.0
    %136 = vmatpush2.msra.mxu0 0.0
    %137 = vmatprep.mubr.f32.mxu0 0.0
    %138 = vmatmul.mubr.f32.gmra.mxu0 %v67
    %v139 = vpop.f32.mrf.mxu0
    %v140 = vadd.f32 %v54, %v139
    %v141 = vpop.f32.mrf.mxu0
    %142 = vmatprep.mubr.f32.mxu0 0.0
    %143 = vmatmul.mubr.f32.gmra.mxu0 %v69
    %v144 = vpop.f32.mrf.mxu0
    %v145 = vadd.f32 %v59, %v144
    %v146 = vpop.f32.mrf.mxu0
    %147 = vmatprep.mubr.f32.mxu0 0.0
    %148 = vmatmul.mubr.f32.gmra.mxu0 %v71
    %v149 = vpop.f32.mrf.mxu0
    %v150 = vadd.f32 %v64, %v149
    %v151 = vpop.f32.mrf.mxu0
    %152 = vdwg.mxu0
    %vm153 = vcmask 261120
    %v154 = vsel %vm153, %v140, 0.0
    %v155 = vsel %vm153, %v145, 0.0
    %v156 = vadd.f32 %v154, %v155
    %vm157 = vcmask 257024
    %v158 = vsel %vm157, %v150, 0.0
    %v159 = vadd.f32 %v156, %v158
    %v160 = vrot.slane %v159, 4
    %v161 = vadd.f32 %v159, %v160
    %v162 = vrot.slane %v161, 2
    %v163 = vadd.f32 %v161, %v162
    %v164 = vrot.slane %v163, 1
    %v165 = vadd.f32 %v163, %v164
    %v166 = vrcp.pop 20.0
    %v167 = vmul.f32 %v165, %v166
    %v168 = vmul.f32 %v140, %v140
    %v169 = vmul.f32 %v145, %v145
    %v170 = vmul.f32 %v150, %v150
    %v171 = vsel %vm153, %v168, 0.0
    %v172 = vsel %vm153, %v169, 0.0
    %v173 = vadd.f32 %v171, %v172
    %v174 = vsel %vm157, %v170, 0.0
    %v175 = vadd.f32 %v173, %v174
    %v176 = vrot.slane %v175, 4
    %v177 = vadd.f32 %v175, %v176
    %v178 = vrot.slane %v177, 2
    %v179 = vadd.f32 %v177, %v178
    %v180 = vrot.slane %v179, 1
    %v181 = vadd.f32 %v179, %v180
    %v182 = vmul.f32 %v181, %v166
    %v183 = vmul.f32 %v167, %v167
    %v184 = vsub.f32 %v182, %v183
    %v185 = vsub.f32 %v140, %v167
    %v186 = vsub.f32 %v145, %v167
    %v187 = vsub.f32 %v150, %v167
    %v188 = vadd.f32 %v184, 1e-05
    %v189 = vrsqrt.pop %v188
    %v190 = vmul.f32 %v185, %v189
    %v191 = vmul.f32 %v186, %v189
    %v192 = vmul.f32 %v187, %v189
    %193 = vset.pattern.permute.xlu0 9
    %194 = vperm.xlu0 %193, %v39
    %v195 = vpop.permute.xlu0 %194
    %197 = vset.pattern.permute.xlu0 9
    %198 = vperm.xlu0 %197, %v40
    %v199 = vpop.permute.xlu0 %198
    %201 = vset.pattern.permute.xlu0 9
    %202 = vperm.xlu0 %201, %v41
    %v203 = vpop.permute.xlu0 %202
    %v205 = vmul.f32 %v190, %v195
    %v206 = vmul.f32 %v191, %v199
    %v207 = vmul.f32 %v192, %v203
    %208 = vset.pattern.permute.xlu0 10
    %209 = vperm.xlu0 %208, %v39
    %v210 = vpop.permute.xlu0 %209
    %212 = vset.pattern.permute.xlu0 10
    %213 = vperm.xlu0 %212, %v40
    %v214 = vpop.permute.xlu0 %213
    %216 = vset.pattern.permute.xlu0 10
    %217 = vperm.xlu0 %216, %v41
    %v218 = vpop.permute.xlu0 %217
    %v220 = vadd.f32 %v205, %v210
    %v221 = vadd.f32 %v206, %v214
    %v222 = vadd.f32 %v207, %v218
    %v223 = vmax.f32 %v220, 0.0
    %v224 = vmax.f32 %v221, 0.0
    %v225 = vmax.f32 %v222, 0.0
    %227 = vset.pattern.permute.xlu0 20
    %228 = vperm.xlu0 %227, %v42
    %v229 = vpop.permute.xlu0 %228
    %232 = vset.pattern.permute.xlu0 20
    %233 = vperm.xlu0 %232, %v43
    %v234 = vpop.permute.xlu0 %233
    %237 = vset.pattern.permute.xlu0 20
    %238 = vperm.xlu0 %237, %v44
    %v239 = vpop.permute.xlu0 %238
    %242 = vset.pattern.permute.xlu0 20
    %243 = vperm.xlu0 %242, %v45
    %v244 = vpop.permute.xlu0 %243
    %vm246 = vcmask 162816
    %v247 = vsel %vm246, %v42, 0
    %v249 = vsel %vm246, %v43, 0
    %v251 = vsel %vm246, %v44, 0
    %v253 = vsel %vm246, %v45, 0
    %vm255 = vcmask 1043456
    %v257 = vsel %vm255, %v225, 0
    %259 = vmatprep.subr.mxu0 0.0
    %260 = vmatpush1.msra.mxu0 0.0
    %261 = vmatprep.subr.mxu0 0.0
    %262 = vmatpush1.msra.mxu0 0.0
    %263 = vmatprep.subr.mxu0 0.0
    %264 = vmatpush1.msra.mxu0 0.0
    %265 = vmatprep.subr.mxu0 0.0
    %266 = vmatpush1.msra.mxu0 0.0
    %267 = vmatprep.subr.mxu0 0.0
    %268 = vmatpush1.msra.mxu0 0.0
    %269 = vmatprep.subr.mxu0 0.0
    %270 = vmatpush1.msra.mxu0 0.0
    %271 = vmatprep.subr.mxu0 0.0
    %272 = vmatpush1.msra.mxu0 0.0
    %273 = vmatprep.subr.mxu0 0.0
    %274 = vmatpush1.msra.mxu0 0.0
    %275 = vmatprep.subr.mxu0 0.0
    %276 = vmatpush1.msra.mxu0 0.0
    %277 = vmatprep.subr.mxu0 0.0
    %278 = vmatpush1.msra.mxu0 0.0
    %279 = vmatprep.subr.mxu0 0.0
    %280 = vmatpush1.msra.mxu0 0.0
    %281 = vmatprep.subr.mxu0 0.0
    %282 = vmatpush1.msra.mxu0 0.0
    %283 = vmatprep.subr.mxu0 0.0
    %284 = vmatpush1.msra.mxu0 0.0
    %285 = vmatprep.subr.mxu0 0.0
    %286 = vmatpush1.msra.mxu0 %v257
    %287 = vmatprep.subr.mxu0 0.0
    %288 = vmatpush1.msra.mxu0 %v224
    %289 = vmatprep.subr.mxu0 0.0
    %290 = vmatpush1.msra.mxu0 %v223
    %291 = vmatprep.subr.mxu0 0.0
    %292 = vmatpush2.msra.mxu0 0.0
    %293 = vmatprep.subr.mxu0 0.0
    %294 = vmatpush2.msra.mxu0 0.0
    %295 = vmatprep.subr.mxu0 0.0
    %296 = vmatpush2.msra.mxu0 0.0
    %297 = vmatprep.subr.mxu0 0.0
    %298 = vmatpush2.msra.mxu0 0.0
    %299 = vmatprep.subr.mxu0 0.0
    %300 = vmatpush2.msra.mxu0 0.0
    %301 = vmatprep.subr.mxu0 0.0
    %302 = vmatpush2.msra.mxu0 0.0
    %303 = vmatprep.subr.mxu0 0.0
    %304 = vmatpush2.msra.mxu0 0.0
    %305 = vmatprep.subr.mxu0 0.0
    %306 = vmatpush2.msra.mxu0 0.0
    %307 = vmatprep.subr.mxu0 0.0
    %308 = vmatpush2.msra.mxu0 0.0
    %309 = vmatprep.subr.mxu0 0.0
    %310 = vmatpush2.msra.mxu0 0.0
    %311 = vmatprep.subr.mxu0 0.0
    %312 = vmatpush2.msra.mxu0 0.0
    %313 = vmatprep.subr.mxu0 0.0
    %314 = vmatpush2.msra.mxu0 0.0
    %315 = vmatprep.subr.mxu0 0.0
    %316 = vmatpush2.msra.mxu0 0.0
    %317 = vmatprep.subr.mxu0 0.0
    %318 = vmatpush2.msra.mxu0 0.0
    %319 = vmatprep.subr.mxu0 0.0
    %320 = vmatpush2.msra.mxu0 0.0
    %321 = vmatprep.subr.mxu0 0.0
    %322 = vmatpush2.msra.mxu0 0.0
    %323 = vmatprep.mubr.f32.mxu0 0.0
    %324 = vmatmul.mubr.f32.gmra.mxu0 %v247
    %v325 = vpop.f32.mrf.mxu0
    %v326 = vadd.f32 %v229, %v325
    %v327 = vpop.f32.mrf.mxu0
    %328 = vmatprep.mubr.f32.mxu0 0.0
    %329 = vmatmul.mubr.f32.gmra.mxu0 %v249
    %v330 = vpop.f32.mrf.mxu0
    %v331 = vadd.f32 %v234, %v330
    %v332 = vpop.f32.mrf.mxu0
    %333 = vmatprep.mubr.f32.mxu0 0.0
    %334 = vmatmul.mubr.f32.gmra.mxu0 %v251
    %v335 = vpop.f32.mrf.mxu0
    %v336 = vadd.f32 %v239, %v335
    %v337 = vpop.f32.mrf.mxu0
    %338 = vmatprep.mubr.f32.mxu0 0.0
    %339 = vmatmul.mubr.f32.gmra.mxu0 %v253
    %v340 = vpop.f32.mrf.mxu0
    %v341 = vadd.f32 %v244, %v340
    %v342 = vpop.f32.mrf.mxu0
    %343 = vdwg.mxu0
    %v344 = vsel %vm153, %v326, 0.0
    %v345 = vsel %vm153, %v331, 0.0
    %v346 = vadd.f32 %v344, %v345
    %v347 = vsel %vm153, %v336, 0.0
    %v348 = vadd.f32 %v346, %v347
    %vm349 = vcmask 259072
    %v350 = vsel %vm349, %v341, 0.0
    %v351 = vadd.f32 %v348, %v350
    %v352 = vrot.slane %v351, 4
    %v353 = vadd.f32 %v351, %v352
    %v354 = vrot.slane %v353, 2
    %v355 = vadd.f32 %v353, %v354
    %v356 = vrot.slane %v355, 1
    %v357 = vadd.f32 %v355, %v356
    %v358 = vrcp.pop 30.0
    %v359 = vmul.f32 %v357, %v358
    %v360 = vmul.f32 %v326, %v326
    %v361 = vmul.f32 %v331, %v331
    %v362 = vmul.f32 %v336, %v336
    %v363 = vmul.f32 %v341, %v341
    %v364 = vsel %vm153, %v360, 0.0
    %v365 = vsel %vm153, %v361, 0.0
    %v366 = vadd.f32 %v364, %v365
    %v367 = vsel %vm153, %v362, 0.0
    %v368 = vadd.f32 %v366, %v367
    %v369 = vsel %vm349, %v363, 0.0
    %v370 = vadd.f32 %v368, %v369
    %v371 = vrot.slane %v370, 4
    %v372 = vadd.f32 %v370, %v371
    %v373 = vrot.slane %v372, 2
    %v374 = vadd.f32 %v372, %v373
    %v375 = vrot.slane %v374, 1
    %v376 = vadd.f32 %v374, %v375
    %v377 = vmul.f32 %v376, %v358
    %v378 = vmul.f32 %v359, %v359
    %v379 = vsub.f32 %v377, %v378
    %v380 = vsub.f32 %v326, %v359
    %v381 = vsub.f32 %v331, %v359
    %v382 = vsub.f32 %v336, %v359
    %v383 = vsub.f32 %v341, %v359
    %v384 = vadd.f32 %v379, 1e-05
    %v385 = vrsqrt.pop %v384
    %v386 = vmul.f32 %v380, %v385
    %v387 = vmul.f32 %v381, %v385
    %v388 = vmul.f32 %v382, %v385
    %v389 = vmul.f32 %v383, %v385
    %390 = vset.pattern.permute.xlu0 21
    %391 = vperm.xlu0 %390, %v42
    %v392 = vpop.permute.xlu0 %391
    %394 = vset.pattern.permute.xlu0 21
    %395 = vperm.xlu0 %394, %v43
    %v396 = vpop.permute.xlu0 %395
    %398 = vset.pattern.permute.xlu0 21
    %399 = vperm.xlu0 %398, %v44
    %v400 = vpop.permute.xlu0 %399
    %402 = vset.pattern.permute.xlu0 21
    %403 = vperm.xlu0 %402, %v45
    %v404 = vpop.permute.xlu0 %403
    %v406 = vmul.f32 %v386, %v392
    %v407 = vmul.f32 %v387, %v396
    %v408 = vmul.f32 %v388, %v400
    %v409 = vmul.f32 %v389, %v404
    %410 = vset.pattern.permute.xlu0 22
    %411 = vperm.xlu0 %410, %v42
    %v412 = vpop.permute.xlu0 %411
    %414 = vset.pattern.permute.xlu0 22
    %415 = vperm.xlu0 %414, %v43
    %v416 = vpop.permute.xlu0 %415
    %418 = vset.pattern.permute.xlu0 22
    %419 = vperm.xlu0 %418, %v44
    %v420 = vpop.permute.xlu0 %419
    %422 = vset.pattern.permute.xlu0 22
    %423 = vperm.xlu0 %422, %v45
    %v424 = vpop.permute.xlu0 %423
    %v426 = vadd.f32 %v406, %v412
    %v427 = vadd.f32 %v407, %v416
    %v428 = vadd.f32 %v408, %v420
    %v429 = vadd.f32 %v409, %v424
    %v430 = vmax.f32 %v426, 0.0
    %v431 = vmax.f32 %v427, 0.0
    %v432 = vmax.f32 %v428, 0.0
    %v433 = vmax.f32 %v429, 0.0
    %435 = vset.pattern.permute.xlu0 0
    %436 = vperm.xlu0 %435, %v46
    %v437 = vpop.permute.xlu0 %436
    %440 = vset.pattern.permute.xlu0 0
    %441 = vperm.xlu0 %440, %v47
    %v442 = vpop.permute.xlu0 %441
    %445 = vset.pattern.permute.xlu0 0
    %446 = vperm.xlu0 %445, %v48
    %v447 = vpop.permute.xlu0 %446
    %450 = vset.pattern.permute.xlu0 0
    %451 = vperm.xlu0 %450, %v49
    %v452 = vpop.permute.xlu0 %451
    %v454 = vmul.f32 %v430, %v437
    %v455 = vmul.f32 %v431, %v442
    %v456 = vmul.f32 %v432, %v447
    %v457 = vmul.f32 %v433, %v452
    %v458 = vsel %vm153, %v454, 0.0
    %v459 = vsel %vm153, %v455, 0.0
    %v460 = vadd.f32 %v458, %v459
    %v461 = vsel %vm153, %v456, 0.0
    %v462 = vadd.f32 %v460, %v461
    %v463 = vsel %vm349, %v457, 0.0
    %v464 = vadd.f32 %v462, %v463
    %v465 = vrot.slane %v464, 4
    %v466 = vadd.f32 %v464, %v465
    %v467 = vrot.slane %v466, 2
    %v468 = vadd.f32 %v466, %v467
    %v469 = vrot.slane %v468, 1
    %v470 = vadd.f32 %v468, %v469
    %472 = vset.pattern.permute.xlu0 0
    %473 = vperm.xlu0 %472, %v50
    %v474 = vpop.permute.xlu0 %473
    %v476 = vadd.f32 %v470, %v474
    %v477 = vtanh.pop %v476
    %vm478 = vcmask 253952
    %479 = vst.msk [vmem:[#allocation7] sm:$0x1] %vm478, %v477
    // Predicated region
    $region18: #{actor_forward.1} parent=1 // pred_check
      _
    $region19: #{actor_forward.1} parent=1 // pred_check_branch
      %481 = sbr.rel (0) target = $region21
    $region20: #{actor_forward.1} parent=1 // pred_region
      %s483 = ssub.s32 16, 16
      %484 = vsyncadd [#allocation4], %s483
      %s486 = sshll.u32 [#allocation7], 4
      %s487 = int_to_ptr.vmem [resolvable:$true] %s486
      %489 = dma.vmem_to_hbm [thread:$0]  %s487, 16, %s2, [#allocation4]
    $region21: #{actor_forward.1} parent=1 // pred_fallthru
      _
    // Predicated region
    $region22: #{actor_forward.1} parent=1 // pred_check
      _
    $region23: #{actor_forward.1} parent=1 // pred_check_branch
      %491 = sbr.rel (0) target = $region25
    $region24: #{actor_forward.1} parent=1 // pred_region
      %492 = dma.done [#allocation4], 16
    $region25: #{actor_forward.1} parent=1 // pred_fallthru
      _
    %493 = vsyncpa [#allocation3], 1
    %494 = vsyncpa [#allocation6], 1
    %495 = vsyncpa [#allocation4], 1

</llo_original>
